<compile_context>
chip_gen: v5e
topology: v5e:2x2
jax: 0.10.0
libtpu: 0.0.40
codegen_flags: <defaults>
</compile_context>

<pallas_src>
import math

import jax
import jax.numpy as jnp
from jax.experimental import pallas as pl
from jax.experimental.pallas import tpu as pltpu

LEAK = 0.01  # nn.LeakyReLU default negative_slope


def _leaky(x):
    return jnp.where(x > 0, x, LEAK * x)


# ---------------------------------------------------------------------------
# Fused kernel: conv1 -> lrelu -> conv2 -> lrelu -> conv3 on one spatial tile
# ---------------------------------------------------------------------------
def entropy_params_kernel(x_ref, w1_ref, b1_ref, w2_ref, b2_ref, w3_ref,
                          b3_ref, o_ref):
    """x_ref: (Cin, T)   w_k: (Ck, Ck-1)   b_k: (Ck, 1)   o_ref: (C3, T)."""
    x = x_ref[...]
    h = jnp.dot(w1_ref[...], x, preferred_element_type=jnp.float32)
    h = _leaky(h + b1_ref[...]).astype(x.dtype)
    h = jnp.dot(w2_ref[...], h, preferred_element_type=jnp.float32)
    h = _leaky(h + b2_ref[...]).astype(x.dtype)
    o = jnp.dot(w3_ref[...], h, preferred_element_type=jnp.float32)
    o_ref[...] = (o + b3_ref[...]).astype(o_ref.dtype)


# ---------------------------------------------------------------------------
# Wrapper
# ---------------------------------------------------------------------------
def _pick_tile_hw(hw, n, c_in, c1, c2, c3, elem_bytes):
    """Spatial (lane) tile: multiple of 128, VMEM-budgeted, >=2 grid units."""
    if hw <= 128 or hw % 128 != 0:
        # Last block dim must be a multiple of 128 OR equal the full extent;
        # fall back to one full-width block for odd spatial sizes.
        return hw
    budget = 16 * 1024 * 1024  # conservative: fits v7x scoped VMEM w/ 2x bufs
    per_px = (2 * c_in + c1 + c2 + 2 * c3) * elem_bytes
    cap = max(128, min(2048, (budget // max(per_px, 1)) // 128 * 128))
    tile = min(cap, hw)
    # Ensure at least 2 parallel grid units (v7x has 2 TensorCores per chip).
    if n * pl.cdiv(hw, tile) < 2 and tile > 128:
        tile = max(128, (tile // 2) // 128 * 128)
    return tile


def entropy_parameters_pallas(x_nchw, params, *, compute_dtype=None):
    n, c_in, h, w = x_nchw.shape
    hw = h * w
    cd = compute_dtype or x_nchw.dtype

    w1 = params["w1"][:, :, 0, 0].astype(cd)          # (C1, Cin)
    w2 = params["w2"][:, :, 0, 0].astype(cd)          # (C2, C1)
    w3 = params["w3"][:, :, 0, 0].astype(cd)          # (C3, C2)
    b1 = params["b1"].reshape(-1, 1).astype(jnp.float32)
    b2 = params["b2"].reshape(-1, 1).astype(jnp.float32)
    b3 = params["b3"].reshape(-1, 1).astype(jnp.float32)
    c1, c2, c3 = w1.shape[0], w2.shape[0], w3.shape[0]

    x = x_nchw.reshape(n, c_in, hw).astype(cd)        # no transposes needed

    elem_bytes = jnp.dtype(cd).itemsize
    tile_hw = _pick_tile_hw(hw, n, c_in, c1, c2, c3, elem_bytes)
    grid = (n, pl.cdiv(hw, tile_hw))

    out = pl.pallas_call(
        entropy_params_kernel,
        out_shape=jax.ShapeDtypeStruct((n, c3, hw), x_nchw.dtype),
        grid=grid,
        in_specs=[
            # activations: one (Cin, tile_hw) slab per (batch, spatial tile)
            pl.BlockSpec((pl.Squeezed(), c_in, tile_hw), lambda i, j: (i, 0, j)),
            # weights / biases: constant index_map -> resident across the grid
            pl.BlockSpec((c1, c_in), lambda i, j: (0, 0)),
            pl.BlockSpec((c1, 1), lambda i, j: (0, 0)),
            pl.BlockSpec((c2, c1), lambda i, j: (0, 0)),
            pl.BlockSpec((c2, 1), lambda i, j: (0, 0)),
            pl.BlockSpec((c3, c2), lambda i, j: (0, 0)),
            pl.BlockSpec((c3, 1), lambda i, j: (0, 0)),
        ],
        out_specs=pl.BlockSpec((pl.Squeezed(), c3, tile_hw),
                               lambda i, j: (i, 0, j)),
        compiler_params=pltpu.CompilerParams(
            dimension_semantics=("parallel", "parallel")),
    )(x, w1, b1, w2, b2, w3, b3)

    return out.reshape(n, c3, h, w)


# ---------------------------------------------------------------------------
# Deterministic parameter init (PyTorch Conv2d default uniform bounds)
# ---------------------------------------------------------------------------
def init_params(key, channel_in):
    channel_mid = channel_in // 4
    c1 = channel_mid * 10 // 3
    c2 = channel_mid * 8 // 3
    c3 = channel_mid * 2
    keys = jax.random.split(key, 6)

    def conv_init(kw, kb, ci, co):
        bound = 1.0 / math.sqrt(ci)  # fan_in = ci * 1 * 1
        wgt = jax.random.uniform(kw, (co, ci, 1, 1), jnp.float32, -bound, bound)
        bias = jax.random.uniform(kb, (co,), jnp.float32, -bound, bound)
        return wgt, bias

    w1, b1 = conv_init(keys[0], keys[1], channel_in, c1)
    w2, b2 = conv_init(keys[2], keys[3], c1, c2)
    w3, b3 = conv_init(keys[4], keys[5], c2, c3)
    return {"w1": w1, "b1": b1, "w2": w2, "b2": b2, "w3": w3, "b3": b3}


# ---------------------------------------------------------------------------
# Pure-JAX reference (semantics check)
# ---------------------------------------------------------------------------
def entropy_parameters_ref(x, params):
    def conv1x1(inp, wgt, bias):
        out = jnp.einsum("nchw,oc->nohw", inp, wgt[:, :, 0, 0])
        return out + bias[None, :, None, None]

    y = conv1x1(x, params["w1"], params["b1"])
    y = jnp.where(y > 0, y, LEAK * y)
    y = conv1x1(y, params["w2"], params["b2"])
    y = jnp.where(y > 0, y, LEAK * y)
    return conv1x1(y, params["w3"], params["b3"])


if __name__ == "__main__":
    key = jax.random.PRNGKey(0)
    kx, kp = jax.random.split(key)

    # channel_in=48 -> mid=12 -> conv dims 48 -> 40 -> 32 -> 24
    N, C_IN, H, W = 2, 48, 16, 16
    x = jax.random.normal(kx, (N, C_IN, H, W), jnp.float32)
    params = init_params(kp, C_IN)

    out = entropy_parameters_pallas(x, params)
    out = jax.block_until_ready(out)

    ref = entropy_parameters_ref(x, params)
    c_out = params["w3"].shape[0]
    assert out.shape == (N, c_out, H, W), out.shape
    max_err = float(jnp.max(jnp.abs(out - ref)))
    assert jnp.allclose(out, ref, atol=2e-3, rtol=2e-3), max_err

    print("KERNEL_OK")
</pallas_src>

<mosaic_0001>
module attributes {stable_mosaic.version = 11 : i64} {
  func.func @entropy_params_kernel(%arg0: i32, %arg1: i32, %arg2: memref<1x48x256xf32, #tpu.memory_space<vmem>>, %arg3: memref<40x48xf32, #tpu.memory_space<vmem>>, %arg4: memref<40x1xf32, #tpu.memory_space<vmem>>, %arg5: memref<32x40xf32, #tpu.memory_space<vmem>>, %arg6: memref<32x1xf32, #tpu.memory_space<vmem>>, %arg7: memref<24x32xf32, #tpu.memory_space<vmem>>, %arg8: memref<24x1xf32, #tpu.memory_space<vmem>>, %arg9: memref<1x24x256xf32, #tpu.memory_space<vmem>>) attributes {dimension_semantics = [#tpu.dimension_semantics<parallel>, #tpu.dimension_semantics<parallel>], iteration_bounds = array<i64: 2, 1>, scalar_prefetch = 0 : i64, scratch_operands = 0 : i64, tpu.core_type = #tpu.core_type<tc>, window_params = [{transform_indices = @transform_0, window_bounds = array<i64: 1, 48, 256>}, {pipeline_mode = #tpu.pipeline_mode<synchronous>, transform_indices = @transform_1, window_bounds = array<i64: 40, 48>}, {pipeline_mode = #tpu.pipeline_mode<synchronous>, transform_indices = @transform_2, window_bounds = array<i64: 40, 1>}, {pipeline_mode = #tpu.pipeline_mode<synchronous>, transform_indices = @transform_3, window_bounds = array<i64: 32, 40>}, {pipeline_mode = #tpu.pipeline_mode<synchronous>, transform_indices = @transform_4, window_bounds = array<i64: 32, 1>}, {pipeline_mode = #tpu.pipeline_mode<synchronous>, transform_indices = @transform_5, window_bounds = array<i64: 24, 32>}, {pipeline_mode = #tpu.pipeline_mode<synchronous>, transform_indices = @transform_6, window_bounds = array<i64: 24, 1>}, {transform_indices = @transform_7, window_bounds = array<i64: 1, 24, 256>}]} {
    %c0 = arith.constant 0 : index
    %c0_0 = arith.constant 0 : index
    %c0_1 = arith.constant 0 : index
    %0 = vector.load %arg2[%c0, %c0_0, %c0_1] : memref<1x48x256xf32, #tpu.memory_space<vmem>>, vector<1x48x256xf32>
    %1 = vector.shape_cast %0 : vector<1x48x256xf32> to vector<48x256xf32>
    %c0_2 = arith.constant 0 : index
    %c0_3 = arith.constant 0 : index
    %2 = vector.load %arg3[%c0_2, %c0_3] : memref<40x48xf32, #tpu.memory_space<vmem>>, vector<40x48xf32>
    %cst = arith.constant dense<0.000000e+00> : vector<40x256xf32>
    %3 = tpu.matmul %2, %1, %cst {dimension_numbers = #tpu.dot_dimension_numbers<[1], [0], [0], [1], [0, 0, 1, 1], [], []>} : vector<40x48xf32>, vector<48x256xf32>, vector<40x256xf32> -> vector<40x256xf32>
    %c0_4 = arith.constant 0 : index
    %c0_5 = arith.constant 0 : index
    %4 = vector.load %arg4[%c0_4, %c0_5] : memref<40x1xf32, #tpu.memory_space<vmem>>, vector<40x1xf32>
    %5 = vector.broadcast %4 : vector<40x1xf32> to vector<40x256xf32>
    %6 = arith.addf %3, %5 : vector<40x256xf32>
    %cst_6 = arith.constant 0.000000e+00 : f32
    %7 = vector.broadcast %cst_6 : f32 to vector<40x256xf32>
    %8 = arith.cmpf ogt, %6, %7 : vector<40x256xf32>
    %cst_7 = arith.constant 0.00999999977 : f32
    %9 = vector.broadcast %cst_7 : f32 to vector<40x256xf32>
    %10 = arith.mulf %9, %6 : vector<40x256xf32>
    %11 = arith.select %8, %6, %10 : vector<40x256xi1>, vector<40x256xf32>
    %c0_8 = arith.constant 0 : index
    %c0_9 = arith.constant 0 : index
    %12 = vector.load %arg5[%c0_8, %c0_9] : memref<32x40xf32, #tpu.memory_space<vmem>>, vector<32x40xf32>
    %cst_10 = arith.constant dense<0.000000e+00> : vector<32x256xf32>
    %13 = tpu.matmul %12, %11, %cst_10 {dimension_numbers = #tpu.dot_dimension_numbers<[1], [0], [0], [1], [0, 0, 1, 1], [], []>} : vector<32x40xf32>, vector<40x256xf32>, vector<32x256xf32> -> vector<32x256xf32>
    %c0_11 = arith.constant 0 : index
    %c0_12 = arith.constant 0 : index
    %14 = vector.load %arg6[%c0_11, %c0_12] : memref<32x1xf32, #tpu.memory_space<vmem>>, vector<32x1xf32>
    %15 = vector.broadcast %14 : vector<32x1xf32> to vector<32x256xf32>
    %16 = arith.addf %13, %15 : vector<32x256xf32>
    %cst_13 = arith.constant 0.000000e+00 : f32
    %17 = vector.broadcast %cst_13 : f32 to vector<32x256xf32>
    %18 = arith.cmpf ogt, %16, %17 : vector<32x256xf32>
    %cst_14 = arith.constant 0.00999999977 : f32
    %19 = vector.broadcast %cst_14 : f32 to vector<32x256xf32>
    %20 = arith.mulf %19, %16 : vector<32x256xf32>
    %21 = arith.select %18, %16, %20 : vector<32x256xi1>, vector<32x256xf32>
    %c0_15 = arith.constant 0 : index
    %c0_16 = arith.constant 0 : index
    %22 = vector.load %arg7[%c0_15, %c0_16] : memref<24x32xf32, #tpu.memory_space<vmem>>, vector<24x32xf32>
    %cst_17 = arith.constant dense<0.000000e+00> : vector<24x256xf32>
    %23 = tpu.matmul %22, %21, %cst_17 {dimension_numbers = #tpu.dot_dimension_numbers<[1], [0], [0], [1], [0, 0, 1, 1], [], []>} : vector<24x32xf32>, vector<32x256xf32>, vector<24x256xf32> -> vector<24x256xf32>
    %c0_18 = arith.constant 0 : index
    %c0_19 = arith.constant 0 : index
    %24 = vector.load %arg8[%c0_18, %c0_19] : memref<24x1xf32, #tpu.memory_space<vmem>>, vector<24x1xf32>
    %25 = vector.broadcast %24 : vector<24x1xf32> to vector<24x256xf32>
    %26 = arith.addf %23, %25 : vector<24x256xf32>
    %c0_20 = arith.constant 0 : index
    %c0_21 = arith.constant 0 : index
    %c0_22 = arith.constant 0 : index
    %27 = vector.load %arg9[%c0_20, %c0_21, %c0_22] : memref<1x24x256xf32, #tpu.memory_space<vmem>>, vector<1x24x256xf32>
    %28 = vector.shape_cast %27 : vector<1x24x256xf32> to vector<24x256xf32>
    %29 = vector.shape_cast %26 : vector<24x256xf32> to vector<1x24x256xf32>
    tpu.vector_store %arg9[%c0_20, %c0_21, %c0_22], %29 {strides = array<i32>} : memref<1x24x256xf32, #tpu.memory_space<vmem>>, vector<1x24x256xf32>,
    return
  }
  func.func @transform_0(%arg0: i32, %arg1: i32) -> (i32, i32, i32) {
    %c0_i32 = arith.constant 0 : i32
    %c0_i32_0 = arith.constant 0 : i32
    return %arg0, %c0_i32, %arg1 : i32, i32, i32
  }
  func.func @transform_1(%arg0: i32, %arg1: i32) -> (i32, i32) {
    %c0_i32 = arith.constant 0 : i32
    %c0_i32_0 = arith.constant 0 : i32
    %c0_i32_1 = arith.constant 0 : i32
    return %c0_i32, %c0_i32_0 : i32, i32
  }
  func.func @transform_2(%arg0: i32, %arg1: i32) -> (i32, i32) {
    %c0_i32 = arith.constant 0 : i32
    %c0_i32_0 = arith.constant 0 : i32
    %c0_i32_1 = arith.constant 0 : i32
    return %c0_i32, %c0_i32_0 : i32, i32
  }
  func.func @transform_3(%arg0: i32, %arg1: i32) -> (i32, i32) {
    %c0_i32 = arith.constant 0 : i32
    %c0_i32_0 = arith.constant 0 : i32
    %c0_i32_1 = arith.constant 0 : i32
    return %c0_i32, %c0_i32_0 : i32, i32
  }
  func.func @transform_4(%arg0: i32, %arg1: i32) -> (i32, i32) {
    %c0_i32 = arith.constant 0 : i32
    %c0_i32_0 = arith.constant 0 : i32
    %c0_i32_1 = arith.constant 0 : i32
    return %c0_i32, %c0_i32_0 : i32, i32
  }
  func.func @transform_5(%arg0: i32, %arg1: i32) -> (i32, i32) {
    %c0_i32 = arith.constant 0 : i32
    %c0_i32_0 = arith.constant 0 : i32
    %c0_i32_1 = arith.constant 0 : i32
    return %c0_i32, %c0_i32_0 : i32, i32
  }
  func.func @transform_6(%arg0: i32, %arg1: i32) -> (i32, i32) {
    %c0_i32 = arith.constant 0 : i32
    %c0_i32_0 = arith.constant 0 : i32
    %c0_i32_1 = arith.constant 0 : i32
    return %c0_i32, %c0_i32_0 : i32, i32
  }
  func.func @transform_7(%arg0: i32, %arg1: i32) -> (i32, i32, i32) {
    %c0_i32 = arith.constant 0 : i32
    %c0_i32_0 = arith.constant 0 : i32
    return %arg0, %c0_i32, %arg1 : i32, i32, i32
  }
}

</mosaic_0001>

<llo_original>
// kernel: tpu_custom_call.1
$region0: #{tpu_custom_call.1}
  #allocation0 [shape = 'u32[]', space=smem, size = 0x4, offset = 0x4, fixed_abs, tag = 'smem constant byte address 0x4 - core index']
  #allocation1 [shape = 'u32[72,128]{1,0:T(1,128)}', space=vmem, size = 0x9000, scoped, tag = 'internal scratch']
  %s0 = inlined_call_operand.hbm [shape: f32[2,48,256], index: 0, kind: input, shape index: {}]
  %s1 = inlined_call_operand.vmem [shape: f32[40,48], index: 1, kind: input, shape index: {}]
  %s2 = inlined_call_operand.vmem [shape: f32[40,1], index: 2, kind: input, shape index: {}]
  %s3 = inlined_call_operand.vmem [shape: f32[32,40], index: 3, kind: input, shape index: {}]
  %s4 = inlined_call_operand.vmem [shape: f32[32,1], index: 4, kind: input, shape index: {}]
  %s5 = inlined_call_operand.vmem [shape: f32[24,32], index: 5, kind: input, shape index: {}]
  %s6 = inlined_call_operand.vmem [shape: f32[24,1], index: 6, kind: input, shape index: {}]
  %s7 = inlined_call_operand.hbm [shape: f32[2,24,256], index: 7, kind: output, shape index: {}]
  %s8 = sld [smem:[#allocation0]]
  $region65: #{tpu_custom_call.1} parent=0
    _
  %s10 = ssub.s32 1, %s8
  %s11 = scalar_select 0, %s10, %s8
  $region1: #{tpu_custom_call.1} parent=0
    #allocation2 [shape = 'u8[98304]{0}', space=vmem, size = 0x18000, scoped, tag = 'input window, operand 0']
    #allocation3 [shape = 's32[2]{0}', space=sflag, size = 0x8, scoped, tag = 'scoped memory for tpu_custom_call.1']
    #allocation4 [shape = 's32[2]{0}', space=sflag, size = 0x8, scoped, tag = 'scoped memory for tpu_custom_call.1']
    #allocation5 [shape = 'u8[49152]{0}', space=vmem, size = 0xc000, scoped, tag = 'output window, operand 0']
    %12 = vsyncpa [#allocation3], 0
    %s13 = scalar_lea.sflag [#allocation3], 1
    %14 = vsyncpa %s13, 0
    %15 = vsyncpa [#allocation4], 0
    %s16 = scalar_lea.sflag [#allocation4], 1
    %17 = vsyncpa %s16, 0
    loop: start=0, step=1, limit=4
    $region2: #{tpu_custom_call.1} parent=1 // loop_pre_header
      _
    $region3: #{tpu_custom_call.1} parent=1 // loop_header
      %s19 = sphi 0, %s23
      %p20 = scmp.ge.s32.totalorder %s19, 4
      %s26 = sphi 0, %s38
      %s27 = sphi 0, %s34
      %s28 = sphi 0, %s26
      %s29 = sphi 0, %s27
      %s30 = sphi 0, %s28
      %s31 = sphi 0, %s29
      %s43 = sphi 0, %s45
      %s46 = sphi 0, %s43
      %s47 = sphi 0, %s46
      %s63 = sphi 0, %s47
      %s67 = sphi 0, %s67
      %s69 = sphi 0, %s67
      %s70 = sphi 0, %s69
      %s84 = sphi 0, %s70
      %s88 = sphi 0, %s88
      %s90 = sphi 0, %s88
      %s91 = sphi 0, %s90
      %s105 = sphi 0, %s91
      %s109 = sphi 0, %s109
      %s111 = sphi 0, %s109
      %s112 = sphi 0, %s111
      %s126 = sphi 0, %s112
      %s130 = sphi 0, %s130
      %s132 = sphi 0, %s130
      %s133 = sphi 0, %s132
      %s147 = sphi 0, %s133
      %s151 = sphi 0, %s151
      %s153 = sphi 0, %s151
      %s154 = sphi 0, %s153
      %s168 = sphi 0, %s154
      %s172 = sphi 0, %s172
      %s174 = sphi 0, %s172
      %s175 = sphi 0, %s174
      %s189 = sphi 0, %s175
      %s197 = sphi 0, %s199
      %s200 = sphi 0, %s197
      %s201 = sphi 0, %s200
      %s217 = sphi 0, %s201
    $region4: #{tpu_custom_call.1} parent=1 // loop_header_branch
      %22 = sbr.rel (%p20) target = $region8
    $region5: #{tpu_custom_call.1} parent=1 // loop_body
      %s24 = ssub.s32 %s19, 1
      %s25 = ssub.s32 %s19, 2
      %s32 = sadd.s32 1, %s27
      %p33 = scmp.ge.s32.totalorder %s32, 1
      %s34 = scalar_select %p33, 0, %s32
      %s35 = sadd.s32 1, %s26
      %s36 = scalar_select %p33, %s35, %s26
      %p37 = scmp.ge.s32.totalorder %s36, 2
      %s38 = scalar_select %p37, 0, %s36
      %s39 = ssub.s32 %s26, %s38
      %s40 = ssub.s32 %s27, %s34
      %s41 = sor.u32 %s39, %s40
      %p42 = scmp.eq.s32.totalorder %s41, 0
      %s44 = sadd.s32 %s43, 1
      %s45 = scalar_select %p42, %s43, %s44
      %p48 = pneg %p42
      %p49 = scmp.eq.s32.totalorder %s19, 1
      %p50 = por %p48, %p49
      %p51 = scmp.ne.s32.totalorder %s43, %s46
      %p52 = scmp.eq.s32.totalorder %s19, 0
      %p53 = por %p51, %p52
      %p54 = scmp.ne.s32.totalorder %s43, %s46
      %p55 = scmp.eq.s32.totalorder %s24, 1
      %p56 = por %p54, %p55
      %p57 = scmp.ne.s32.totalorder %s46, %s47
      %p58 = scmp.eq.s32.totalorder %s24, 0
      %p59 = por %p57, %p58
      %p60 = scmp.ne.s32.totalorder %s46, %s47
      %p61 = scmp.eq.s32.totalorder %s25, 1
      %p62 = por %p60, %p61
      %p64 = scmp.ne.s32.totalorder %s47, %s63
      %p65 = scmp.eq.s32.totalorder %s25, 0
      %p66 = por %p64, %p65
      %s68 = sadd.s32 %s67, 1
      %p71 = scmp.eq.s32.totalorder %s19, 1
      %p72 = scmp.ne.s32.totalorder %s67, %s69
      %p73 = scmp.eq.s32.totalorder %s19, 0
      %p74 = por %p72, %p73
      %p75 = scmp.ne.s32.totalorder %s67, %s69
      %p76 = scmp.eq.s32.totalorder %s24, 1
      %p77 = por %p75, %p76
      %p78 = scmp.ne.s32.totalorder %s69, %s70
      %p79 = scmp.eq.s32.totalorder %s24, 0
      %p80 = por %p78, %p79
      %p81 = scmp.ne.s32.totalorder %s69, %s70
      %p82 = scmp.eq.s32.totalorder %s25, 1
      %p83 = por %p81, %p82
      %p85 = scmp.ne.s32.totalorder %s70, %s84
      %p86 = scmp.eq.s32.totalorder %s25, 0
      %p87 = por %p85, %p86
      %s89 = sadd.s32 %s88, 1
      %p92 = scmp.eq.s32.totalorder %s19, 1
      %p93 = scmp.ne.s32.totalorder %s88, %s90
      %p94 = scmp.eq.s32.totalorder %s19, 0
      %p95 = por %p93, %p94
      %p96 = scmp.ne.s32.totalorder %s88, %s90
      %p97 = scmp.eq.s32.totalorder %s24, 1
      %p98 = por %p96, %p97
      %p99 = scmp.ne.s32.totalorder %s90, %s91
      %p100 = scmp.eq.s32.totalorder %s24, 0
      %p101 = por %p99, %p100
      %p102 = scmp.ne.s32.totalorder %s90, %s91
      %p103 = scmp.eq.s32.totalorder %s25, 1
      %p104 = por %p102, %p103
      %p106 = scmp.ne.s32.totalorder %s91, %s105
      %p107 = scmp.eq.s32.totalorder %s25, 0
      %p108 = por %p106, %p107
      %s110 = sadd.s32 %s109, 1
      %p113 = scmp.eq.s32.totalorder %s19, 1
      %p114 = scmp.ne.s32.totalorder %s109, %s111
      %p115 = scmp.eq.s32.totalorder %s19, 0
      %p116 = por %p114, %p115
      %p117 = scmp.ne.s32.totalorder %s109, %s111
      %p118 = scmp.eq.s32.totalorder %s24, 1
      %p119 = por %p117, %p118
      %p120 = scmp.ne.s32.totalorder %s111, %s112
      %p121 = scmp.eq.s32.totalorder %s24, 0
      %p122 = por %p120, %p121
      %p123 = scmp.ne.s32.totalorder %s111, %s112
      %p124 = scmp.eq.s32.totalorder %s25, 1
      %p125 = por %p123, %p124
      %p127 = scmp.ne.s32.totalorder %s112, %s126
      %p128 = scmp.eq.s32.totalorder %s25, 0
      %p129 = por %p127, %p128
      %s131 = sadd.s32 %s130, 1
      %p134 = scmp.eq.s32.totalorder %s19, 1
      %p135 = scmp.ne.s32.totalorder %s130, %s132
      %p136 = scmp.eq.s32.totalorder %s19, 0
      %p137 = por %p135, %p136
      %p138 = scmp.ne.s32.totalorder %s130, %s132
      %p139 = scmp.eq.s32.totalorder %s24, 1
      %p140 = por %p138, %p139
      %p141 = scmp.ne.s32.totalorder %s132, %s133
      %p142 = scmp.eq.s32.totalorder %s24, 0
      %p143 = por %p141, %p142
      %p144 = scmp.ne.s32.totalorder %s132, %s133
      %p145 = scmp.eq.s32.totalorder %s25, 1
      %p146 = por %p144, %p145
      %p148 = scmp.ne.s32.totalorder %s133, %s147
      %p149 = scmp.eq.s32.totalorder %s25, 0
      %p150 = por %p148, %p149
      %s152 = sadd.s32 %s151, 1
      %p155 = scmp.eq.s32.totalorder %s19, 1
      %p156 = scmp.ne.s32.totalorder %s151, %s153
      %p157 = scmp.eq.s32.totalorder %s19, 0
      %p158 = por %p156, %p157
      %p159 = scmp.ne.s32.totalorder %s151, %s153
      %p160 = scmp.eq.s32.totalorder %s24, 1
      %p161 = por %p159, %p160
      %p162 = scmp.ne.s32.totalorder %s153, %s154
      %p163 = scmp.eq.s32.totalorder %s24, 0
      %p164 = por %p162, %p163
      %p165 = scmp.ne.s32.totalorder %s153, %s154
      %p166 = scmp.eq.s32.totalorder %s25, 1
      %p167 = por %p165, %p166
      %p169 = scmp.ne.s32.totalorder %s154, %s168
      %p170 = scmp.eq.s32.totalorder %s25, 0
      %p171 = por %p169, %p170
      %s173 = sadd.s32 %s172, 1
      %p176 = scmp.eq.s32.totalorder %s19, 1
      %p177 = scmp.ne.s32.totalorder %s172, %s174
      %p178 = scmp.eq.s32.totalorder %s19, 0
      %p179 = por %p177, %p178
      %p180 = scmp.ne.s32.totalorder %s172, %s174
      %p181 = scmp.eq.s32.totalorder %s24, 1
      %p182 = por %p180, %p181
      %p183 = scmp.ne.s32.totalorder %s174, %s175
      %p184 = scmp.eq.s32.totalorder %s24, 0
      %p185 = por %p183, %p184
      %p186 = scmp.ne.s32.totalorder %s174, %s175
      %p187 = scmp.eq.s32.totalorder %s25, 1
      %p188 = por %p186, %p187
      %p190 = scmp.ne.s32.totalorder %s175, %s189
      %p191 = scmp.eq.s32.totalorder %s25, 0
      %p192 = por %p190, %p191
      %s193 = ssub.s32 %s26, %s38
      %s194 = ssub.s32 %s27, %s34
      %s195 = sor.u32 %s193, %s194
      %p196 = scmp.eq.s32.totalorder %s195, 0
      %s198 = sadd.s32 %s197, 1
      %s199 = scalar_select %p196, %s197, %s198
      %p202 = pneg %p196
      %p203 = scmp.eq.s32.totalorder %s19, 1
      %p204 = por %p202, %p203
      %p205 = scmp.ne.s32.totalorder %s197, %s200
      %p206 = scmp.eq.s32.totalorder %s19, 0
      %p207 = por %p205, %p206
      %p208 = scmp.ne.s32.totalorder %s197, %s200
      %p209 = scmp.eq.s32.totalorder %s24, 1
      %p210 = por %p208, %p209
      %p211 = scmp.ne.s32.totalorder %s200, %s201
      %p212 = scmp.eq.s32.totalorder %s24, 0
      %p213 = por %p211, %p212
      %p214 = scmp.ne.s32.totalorder %s200, %s201
      %p215 = scmp.eq.s32.totalorder %s25, 1
      %p216 = por %p214, %p215
      %p218 = scmp.ne.s32.totalorder %s201, %s217
      %p219 = scmp.eq.s32.totalorder %s25, 0
      %p220 = por %p218, %p219
      %p221 = scmp.le.s32.totalorder 1, %s19
      %p222 = scmp.lt.s32.totalorder %s19, 3
      %p223 = pnand %p221, %p222
      %p224 = pneg %p223
      // Predicated region
      $region9: #{tpu_custom_call.1} parent=5 // pred_check
        _
      $region10: #{tpu_custom_call.1} parent=5 // pred_check_branch
        %226 = sbr.rel (%p223) target = $region12
      $region11: #{tpu_custom_call.1} parent=5 // pred_region
        %s227 = ssub.s32 %s19, 1
        // Predicated region
        $region13: #{tpu_custom_call.1} parent=11 // pred_check
          %p228 = pneg %p80
        $region14: #{tpu_custom_call.1} parent=11 // pred_check_branch
          %230 = sbr.rel (%p228) target = $region16
        $region15: #{tpu_custom_call.1} parent=11 // pred_region
          _
        $region16: #{tpu_custom_call.1} parent=11 // pred_fallthru
          _
        // Predicated region
        $region17: #{tpu_custom_call.1} parent=11 // pred_check
          %p231 = pneg %p101
        $region18: #{tpu_custom_call.1} parent=11 // pred_check_branch
          %233 = sbr.rel (%p231) target = $region20
        $region19: #{tpu_custom_call.1} parent=11 // pred_region
          _
        $region20: #{tpu_custom_call.1} parent=11 // pred_fallthru
          _
        // Predicated region
        $region21: #{tpu_custom_call.1} parent=11 // pred_check
          %p234 = pneg %p122
        $region22: #{tpu_custom_call.1} parent=11 // pred_check_branch
          %236 = sbr.rel (%p234) target = $region24
        $region23: #{tpu_custom_call.1} parent=11 // pred_region
          _
        $region24: #{tpu_custom_call.1} parent=11 // pred_fallthru
          _
        // Predicated region
        $region25: #{tpu_custom_call.1} parent=11 // pred_check
          %p237 = pneg %p143
        $region26: #{tpu_custom_call.1} parent=11 // pred_check_branch
          %239 = sbr.rel (%p237) target = $region28
        $region27: #{tpu_custom_call.1} parent=11 // pred_region
          _
        $region28: #{tpu_custom_call.1} parent=11 // pred_fallthru
          _
        // Predicated region
        $region29: #{tpu_custom_call.1} parent=11 // pred_check
          %p240 = pneg %p164
        $region30: #{tpu_custom_call.1} parent=11 // pred_check_branch
          %242 = sbr.rel (%p240) target = $region32
        $region31: #{tpu_custom_call.1} parent=11 // pred_region
          _
        $region32: #{tpu_custom_call.1} parent=11 // pred_fallthru
          _
        // Predicated region
        $region33: #{tpu_custom_call.1} parent=11 // pred_check
          %p243 = pneg %p185
        $region34: #{tpu_custom_call.1} parent=11 // pred_check_branch
          %245 = sbr.rel (%p243) target = $region36
        $region35: #{tpu_custom_call.1} parent=11 // pred_region
          _
        $region36: #{tpu_custom_call.1} parent=11 // pred_fallthru
          _
      $region12: #{tpu_custom_call.1} parent=5 // pred_fallthru
        _
      %p246 = scmp.lt.s32.totalorder %s19, 2
      // Predicated region
      $region37: #{tpu_custom_call.1} parent=5 // pred_check
        %p247 = pneg %p246
      $region38: #{tpu_custom_call.1} parent=5 // pred_check_branch
        %249 = sbr.rel (%p247) target = $region40
      $region39: #{tpu_custom_call.1} parent=5 // pred_region
        // Predicated region
        $region41: #{tpu_custom_call.1} parent=39 // pred_check
          %p250 = pneg %p53
        $region42: #{tpu_custom_call.1} parent=39 // pred_check_branch
          %252 = sbr.rel (%p250) target = $region44
        $region43: #{tpu_custom_call.1} parent=39 // pred_region
          %s253 = sand.u32 %s43, 1
          %s254 = scalar_lea.sflag [#allocation3], %s253
          %s255 = sand.u32 %s43, 1
          %s256 = smul.addr %s255, 96
          %s257 = scalar_lea.vmem [#allocation2], %s256
          %s258 = smul.u32 2, %s27
          %260 = vsyncadd %s254, 0
          %s261 = smul.addr %s26, 12
          %s262 = sadd.s32 %s258, %s261
          %s263 = smul.addr %s262, 8
          %s264 = scalar_lea.hbm %s0, %s263
          %s265 = sshll.u32 %s264, 4
          %s266 = int_to_ptr.hbm [resolvable:$true] %s265
          %s267 = sshll.u32 %s257, 4
          %s268 = int_to_ptr.vmem [resolvable:$true] %s267
          %273 = dma.hbm_to_vmem [thread:$0]  %s266, 1536, %s268, %s254, 256, 256, 16
        $region44: #{tpu_custom_call.1} parent=39 // pred_fallthru
          _
      $region40: #{tpu_custom_call.1} parent=5 // pred_fallthru
        _
      %p274 = scmp.le.s32.totalorder 1, %s19
      %p275 = scmp.lt.s32.totalorder %s19, 3
      %p276 = pnand %p274, %p275
      %p277 = pneg %p276
      // Predicated region
      $region45: #{tpu_custom_call.1} parent=5 // pred_check
        _
      $region46: #{tpu_custom_call.1} parent=5 // pred_check_branch
        %279 = sbr.rel (%p276) target = $region48
      $region47: #{tpu_custom_call.1} parent=5 // pred_region
        %s280 = ssub.s32 %s19, 1
        %s281 = sand.u32 %s46, 1
        %s282 = scalar_lea.sflag [#allocation3], %s281
        %s283 = sand.u32 %s46, 1
        %s284 = smul.addr %s283, 96
        %s285 = scalar_lea.vmem [#allocation2], %s284
        // Predicated region
        $region49: #{tpu_custom_call.1} parent=47 // pred_check
          %p286 = pneg %p59
        $region50: #{tpu_custom_call.1} parent=47 // pred_check_branch
          %288 = sbr.rel (%p286) target = $region52
        $region51: #{tpu_custom_call.1} parent=47 // pred_region
          %290 = dma.done %s282, 1536
        $region52: #{tpu_custom_call.1} parent=47 // pred_fallthru
          _
        %s291 = sand.u32 %s46, 1
        %s292 = scalar_lea.sflag [#allocation3], %s291
        %s293 = sand.u32 %s46, 1
        %s294 = smul.addr %s293, 96
        %s295 = scalar_lea.vmem [#allocation2], %s294
        %p296 = pneg %p59
        %p297 = pneg %p56
        %p298 = pneg %p80
        %p299 = pneg %p77
        %p300 = pneg %p101
        %p301 = pneg %p98
        %p302 = pneg %p122
        %p303 = pneg %p119
        %p304 = pneg %p143
        %p305 = pneg %p140
        %p306 = pneg %p164
        %p307 = pneg %p161
        %p308 = pneg %p185
        %p309 = pneg %p182
        %p310 = pneg %p213
        %p311 = pneg %p210
        %s312 = sand.u32 %s200, 1
        %s313 = scalar_lea.sflag [#allocation4], %s312
        %s314 = sand.u32 %s200, 1
        %s315 = smul.addr %s314, 48
        %s316 = scalar_lea.vmem [#allocation5], %s315
        %s317 = smul.u32 2, %s29
        %s318 = smul.u32 2, %s29
        %v319 = vld [vmem:[%s285] sm:$0xff]
        %v320 = vld [vmem:[%s285 + $0x8] sm:$0xff]
        %v321 = vld [vmem:[%s285 + $0x10] sm:$0xff]
        %v322 = vld [vmem:[%s285 + $0x18] sm:$0xff]
        %v323 = vld [vmem:[%s285 + $0x20] sm:$0xff]
        %v324 = vld [vmem:[%s285 + $0x28] sm:$0xff]
        %v325 = vld [vmem:[%s285 + $0x30] sm:$0xff]
        %v326 = vld [vmem:[%s285 + $0x38] sm:$0xff]
        %v327 = vld [vmem:[%s285 + $0x40] sm:$0xff]
        %v328 = vld [vmem:[%s285 + $0x48] sm:$0xff]
        %v329 = vld [vmem:[%s285 + $0x50] sm:$0xff]
        %v330 = vld [vmem:[%s285 + $0x58] sm:$0xff]
        %v331 = vld [vmem:[%s1] sm:$0xff]
        %v332 = vld [vmem:[%s1 + $0x8] sm:$0xff]
        %v333 = vld [vmem:[%s1 + $0x10] sm:$0xff]
        %v334 = vld [vmem:[%s1 + $0x18] sm:$0xff]
        %v335 = vld [vmem:[%s1 + $0x20] sm:$0xff]
        %v336 = vld [vmem:[%s2] sm:$0xff]
        %v337 = vld [vmem:[%s2 + $0x8] sm:$0xff]
        %v338 = vld [vmem:[%s2 + $0x10] sm:$0xff]
        %v339 = vld [vmem:[%s2 + $0x18] sm:$0xff]
        %v340 = vld [vmem:[%s2 + $0x20] sm:$0xff]
        %342 = vset.pattern.permute.xlu0 0
        %343 = vperm.xlu0 %342, %v336
        %v344 = vpop.permute.xlu0 %343
        %347 = vset.pattern.permute.xlu0 0
        %348 = vperm.xlu0 %347, %v337
        %v349 = vpop.permute.xlu0 %348
        %352 = vset.pattern.permute.xlu0 0
        %353 = vperm.xlu0 %352, %v338
        %v354 = vpop.permute.xlu0 %353
        %357 = vset.pattern.permute.xlu0 0
        %358 = vperm.xlu0 %357, %v339
        %v359 = vpop.permute.xlu0 %358
        %362 = vset.pattern.permute.xlu0 0
        %363 = vperm.xlu0 %362, %v340
        %v364 = vpop.permute.xlu0 %363
        %vm366 = vcmask 392192
        %v368 = vsel %vm366, %v331, 0
        %v371 = vsel %vm366, %v332, 0
        %v374 = vsel %vm366, %v333, 0
        %v377 = vsel %vm366, %v334, 0
        %v380 = vsel %vm366, %v335, 0
        %382 = vmatpush.msra.mxu0 0.0
        %383 = vmatpush.msra.mxu0 0.0
        %384 = vmatpush.msra.mxu0 0.0
        %385 = vmatpush.msra.mxu0 0.0
        %386 = vmatpush.msra.mxu0 0.0
        %387 = vmatpush.msra.mxu0 0.0
        %388 = vmatpush.msra.mxu0 0.0
        %389 = vmatpush.msra.mxu0 0.0
        %390 = vmatpush.msra.mxu0 0.0
        %391 = vmatpush.msra.mxu0 0.0
        %392 = vmatpush.msra.mxu0 %v329
        %393 = vmatpush.msra.mxu0 %v327
        %394 = vmatpush.msra.mxu0 %v325
        %395 = vmatpush.msra.mxu0 %v323
        %396 = vmatpush.msra.mxu0 %v321
        %397 = vmatpush.msra.mxu0 %v319
        %398 = vmatmul.f32.gmra.mxu0 %v368
        %v399 = vpop.f32.mrf.mxu0
        %v400 = vadd.f32 %v344, %v399
        %401 = vmatmul.f32.gmra.mxu0 %v371
        %v402 = vpop.f32.mrf.mxu0
        %v403 = vadd.f32 %v349, %v402
        %404 = vmatmul.f32.gmra.mxu0 %v374
        %v405 = vpop.f32.mrf.mxu0
        %v406 = vadd.f32 %v354, %v405
        %407 = vmatmul.f32.gmra.mxu0 %v377
        %v408 = vpop.f32.mrf.mxu0
        %v409 = vadd.f32 %v359, %v408
        %410 = vmatmul.f32.gmra.mxu0 %v380
        %v411 = vpop.f32.mrf.mxu0
        %v412 = vadd.f32 %v364, %v411
        %413 = vdwg.mxu0
        %414 = vmatpush.msra.mxu0 0.0
        %415 = vmatpush.msra.mxu0 0.0
        %416 = vmatpush.msra.mxu0 0.0
        %417 = vmatpush.msra.mxu0 0.0
        %418 = vmatpush.msra.mxu0 0.0
        %419 = vmatpush.msra.mxu0 0.0
        %420 = vmatpush.msra.mxu0 0.0
        %421 = vmatpush.msra.mxu0 0.0
        %422 = vmatpush.msra.mxu0 0.0
        %423 = vmatpush.msra.mxu0 0.0
        %424 = vmatpush.msra.mxu0 %v330
        %425 = vmatpush.msra.mxu0 %v328
        %426 = vmatpush.msra.mxu0 %v326
        %427 = vmatpush.msra.mxu0 %v324
        %428 = vmatpush.msra.mxu0 %v322
        %429 = vmatpush.msra.mxu0 %v320
        %430 = vmatmul.f32.gmra.mxu0 %v368
        %v431 = vpop.f32.mrf.mxu0
        %v432 = vadd.f32 %v344, %v431
        %433 = vmatmul.f32.gmra.mxu0 %v371
        %v434 = vpop.f32.mrf.mxu0
        %v435 = vadd.f32 %v349, %v434
        %436 = vmatmul.f32.gmra.mxu0 %v374
        %v437 = vpop.f32.mrf.mxu0
        %v438 = vadd.f32 %v354, %v437
        %439 = vmatmul.f32.gmra.mxu0 %v377
        %v440 = vpop.f32.mrf.mxu0
        %v441 = vadd.f32 %v359, %v440
        %442 = vmatmul.f32.gmra.mxu0 %v380
        %v443 = vpop.f32.mrf.mxu0
        %v444 = vadd.f32 %v364, %v443
        %445 = vdwg.mxu0
        %vm446 = vcmp.gt.f32.partialorder %v400, 0.0
        %vm447 = vcmp.gt.f32.partialorder %v432, 0.0
        %vm448 = vcmp.gt.f32.partialorder %v403, 0.0
        %vm449 = vcmp.gt.f32.partialorder %v435, 0.0
        %vm450 = vcmp.gt.f32.partialorder %v406, 0.0
        %vm451 = vcmp.gt.f32.partialorder %v438, 0.0
        %vm452 = vcmp.gt.f32.partialorder %v409, 0.0
        %vm453 = vcmp.gt.f32.partialorder %v441, 0.0
        %vm454 = vcmp.gt.f32.partialorder %v412, 0.0
        %vm455 = vcmp.gt.f32.partialorder %v444, 0.0
        %v456 = vmul.f32 %v400, 0.01
        %v457 = vmul.f32 %v432, 0.01
        %v458 = vmul.f32 %v403, 0.01
        %v459 = vmul.f32 %v435, 0.01
        %v460 = vmul.f32 %v406, 0.01
        %v461 = vmul.f32 %v438, 0.01
        %v462 = vmul.f32 %v409, 0.01
        %v463 = vmul.f32 %v441, 0.01
        %v464 = vmul.f32 %v412, 0.01
        %v465 = vmul.f32 %v444, 0.01
        %v466 = vsel %vm446, %v400, %v456
        %v467 = vsel %vm447, %v432, %v457
        %v468 = vsel %vm448, %v403, %v458
        %v469 = vsel %vm449, %v435, %v459
        %v470 = vsel %vm450, %v406, %v460
        %v471 = vsel %vm451, %v438, %v461
        %v472 = vsel %vm452, %v409, %v462
        %v473 = vsel %vm453, %v441, %v463
        %v474 = vsel %vm454, %v412, %v464
        %v475 = vsel %vm455, %v444, %v465
        %v476 = vld [vmem:[%s3] sm:$0xff]
        %v477 = vld [vmem:[%s3 + $0x8] sm:$0xff]
        %v478 = vld [vmem:[%s3 + $0x10] sm:$0xff]
        %v479 = vld [vmem:[%s3 + $0x18] sm:$0xff]
        %v480 = vld [vmem:[%s4] sm:$0xff]
        %v481 = vld [vmem:[%s4 + $0x8] sm:$0xff]
        %v482 = vld [vmem:[%s4 + $0x10] sm:$0xff]
        %v483 = vld [vmem:[%s4 + $0x18] sm:$0xff]
        %485 = vset.pattern.permute.xlu0 0
        %486 = vperm.xlu0 %485, %v480
        %v487 = vpop.permute.xlu0 %486
        %490 = vset.pattern.permute.xlu0 0
        %491 = vperm.xlu0 %490, %v481
        %v492 = vpop.permute.xlu0 %491
        %495 = vset.pattern.permute.xlu0 0
        %496 = vperm.xlu0 %495, %v482
        %v497 = vpop.permute.xlu0 %496
        %500 = vset.pattern.permute.xlu0 0
        %501 = vperm.xlu0 %500, %v483
        %v502 = vpop.permute.xlu0 %501
        %vm504 = vcmask 326656
        %v506 = vsel %vm504, %v476, 0
        %v509 = vsel %vm504, %v477, 0
        %v512 = vsel %vm504, %v478, 0
        %v515 = vsel %vm504, %v479, 0
        %517 = vmatpush.msra.mxu0 0.0
        %518 = vmatpush.msra.mxu0 0.0
        %519 = vmatpush.msra.mxu0 0.0
        %520 = vmatpush.msra.mxu0 0.0
        %521 = vmatpush.msra.mxu0 0.0
        %522 = vmatpush.msra.mxu0 0.0
        %523 = vmatpush.msra.mxu0 0.0
        %524 = vmatpush.msra.mxu0 0.0
        %525 = vmatpush.msra.mxu0 0.0
        %526 = vmatpush.msra.mxu0 0.0
        %527 = vmatpush.msra.mxu0 0.0
        %528 = vmatpush.msra.mxu0 %v474
        %529 = vmatpush.msra.mxu0 %v472
        %530 = vmatpush.msra.mxu0 %v470
        %531 = vmatpush.msra.mxu0 %v468
        %532 = vmatpush.msra.mxu0 %v466
        %533 = vmatmul.f32.gmra.mxu0 %v506
        %v534 = vpop.f32.mrf.mxu0
        %v535 = vadd.f32 %v487, %v534
        %536 = vmatmul.f32.gmra.mxu0 %v509
        %v537 = vpop.f32.mrf.mxu0
        %v538 = vadd.f32 %v492, %v537
        %539 = vmatmul.f32.gmra.mxu0 %v512
        %v540 = vpop.f32.mrf.mxu0
        %v541 = vadd.f32 %v497, %v540
        %542 = vmatmul.f32.gmra.mxu0 %v515
        %v543 = vpop.f32.mrf.mxu0
        %v544 = vadd.f32 %v502, %v543
        %545 = vdwg.mxu0
        %546 = vmatpush.msra.mxu0 0.0
        %547 = vmatpush.msra.mxu0 0.0
        %548 = vmatpush.msra.mxu0 0.0
        %549 = vmatpush.msra.mxu0 0.0
        %550 = vmatpush.msra.mxu0 0.0
        %551 = vmatpush.msra.mxu0 0.0
        %552 = vmatpush.msra.mxu0 0.0
        %553 = vmatpush.msra.mxu0 0.0
        %554 = vmatpush.msra.mxu0 0.0
        %555 = vmatpush.msra.mxu0 0.0
        %556 = vmatpush.msra.mxu0 0.0
        %557 = vmatpush.msra.mxu0 %v475
        %558 = vmatpush.msra.mxu0 %v473
        %559 = vmatpush.msra.mxu0 %v471
        %560 = vmatpush.msra.mxu0 %v469
        %561 = vmatpush.msra.mxu0 %v467
        %562 = vmatmul.f32.gmra.mxu0 %v506
        %v563 = vpop.f32.mrf.mxu0
        %v564 = vadd.f32 %v487, %v563
        %565 = vmatmul.f32.gmra.mxu0 %v509
        %v566 = vpop.f32.mrf.mxu0
        %v567 = vadd.f32 %v492, %v566
        %568 = vmatmul.f32.gmra.mxu0 %v512
        %v569 = vpop.f32.mrf.mxu0
        %v570 = vadd.f32 %v497, %v569
        %571 = vmatmul.f32.gmra.mxu0 %v515
        %v572 = vpop.f32.mrf.mxu0
        %v573 = vadd.f32 %v502, %v572
        %574 = vdwg.mxu0
        %vm575 = vcmp.gt.f32.partialorder %v535, 0.0
        %vm576 = vcmp.gt.f32.partialorder %v564, 0.0
        %vm577 = vcmp.gt.f32.partialorder %v538, 0.0
        %vm578 = vcmp.gt.f32.partialorder %v567, 0.0
        %vm579 = vcmp.gt.f32.partialorder %v541, 0.0
        %vm580 = vcmp.gt.f32.partialorder %v570, 0.0
        %vm581 = vcmp.gt.f32.partialorder %v544, 0.0
        %vm582 = vcmp.gt.f32.partialorder %v573, 0.0
        %v583 = vmul.f32 %v535, 0.01
        %v584 = vmul.f32 %v564, 0.01
        %v585 = vmul.f32 %v538, 0.01
        %v586 = vmul.f32 %v567, 0.01
        %v587 = vmul.f32 %v541, 0.01
        %v588 = vmul.f32 %v570, 0.01
        %v589 = vmul.f32 %v544, 0.01
        %v590 = vmul.f32 %v573, 0.01
        %v591 = vsel %vm575, %v535, %v583
        %v592 = vsel %vm576, %v564, %v584
        %v593 = vsel %vm577, %v538, %v585
        %v594 = vsel %vm578, %v567, %v586
        %v595 = vsel %vm579, %v541, %v587
        %v596 = vsel %vm580, %v570, %v588
        %v597 = vsel %vm581, %v544, %v589
        %v598 = vsel %vm582, %v573, %v590
        %v599 = vld [vmem:[%s5] sm:$0xff]
        %v600 = vld [vmem:[%s5 + $0x8] sm:$0xff]
        %v601 = vld [vmem:[%s5 + $0x10] sm:$0xff]
        %v602 = vld [vmem:[%s6] sm:$0xff]
        %v603 = vld [vmem:[%s6 + $0x8] sm:$0xff]
        %v604 = vld [vmem:[%s6 + $0x10] sm:$0xff]
        %606 = vset.pattern.permute.xlu0 0
        %607 = vperm.xlu0 %606, %v602
        %v608 = vpop.permute.xlu0 %607
        %611 = vset.pattern.permute.xlu0 0
        %612 = vperm.xlu0 %611, %v603
        %v613 = vpop.permute.xlu0 %612
        %616 = vset.pattern.permute.xlu0 0
        %617 = vperm.xlu0 %616, %v604
        %v618 = vpop.permute.xlu0 %617
        %vm620 = vcmask 261120
        %v622 = vsel %vm620, %v599, 0
        %v625 = vsel %vm620, %v600, 0
        %v628 = vsel %vm620, %v601, 0
        %630 = vmatpush.msra.mxu0 0.0
        %631 = vmatpush.msra.mxu0 0.0
        %632 = vmatpush.msra.mxu0 0.0
        %633 = vmatpush.msra.mxu0 0.0
        %634 = vmatpush.msra.mxu0 0.0
        %635 = vmatpush.msra.mxu0 0.0
        %636 = vmatpush.msra.mxu0 0.0
        %637 = vmatpush.msra.mxu0 0.0
        %638 = vmatpush.msra.mxu0 0.0
        %639 = vmatpush.msra.mxu0 0.0
        %640 = vmatpush.msra.mxu0 0.0
        %641 = vmatpush.msra.mxu0 0.0
        %642 = vmatpush.msra.mxu0 %v597
        %643 = vmatpush.msra.mxu0 %v595
        %644 = vmatpush.msra.mxu0 %v593
        %645 = vmatpush.msra.mxu0 %v591
        %646 = vmatmul.f32.gmra.mxu0 %v622
        %v647 = vpop.f32.mrf.mxu0
        %v648 = vadd.f32 %v608, %v647
        %649 = vmatmul.f32.gmra.mxu0 %v625
        %v650 = vpop.f32.mrf.mxu0
        %v651 = vadd.f32 %v613, %v650
        %652 = vmatmul.f32.gmra.mxu0 %v628
        %v653 = vpop.f32.mrf.mxu0
        %v654 = vadd.f32 %v618, %v653
        %655 = vdwg.mxu0
        %656 = vmatpush.msra.mxu0 0.0
        %657 = vmatpush.msra.mxu0 0.0
        %658 = vmatpush.msra.mxu0 0.0
        %659 = vmatpush.msra.mxu0 0.0
        %660 = vmatpush.msra.mxu0 0.0
        %661 = vmatpush.msra.mxu0 0.0
        %662 = vmatpush.msra.mxu0 0.0
        %663 = vmatpush.msra.mxu0 0.0
        %664 = vmatpush.msra.mxu0 0.0
        %665 = vmatpush.msra.mxu0 0.0
        %666 = vmatpush.msra.mxu0 0.0
        %667 = vmatpush.msra.mxu0 0.0
        %668 = vmatpush.msra.mxu0 %v598
        %669 = vmatpush.msra.mxu0 %v596
        %670 = vmatpush.msra.mxu0 %v594
        %671 = vmatpush.msra.mxu0 %v592
        %672 = vmatmul.f32.gmra.mxu0 %v622
        %v673 = vpop.f32.mrf.mxu0
        %v674 = vadd.f32 %v608, %v673
        %675 = vmatmul.f32.gmra.mxu0 %v625
        %v676 = vpop.f32.mrf.mxu0
        %v677 = vadd.f32 %v613, %v676
        %678 = vmatmul.f32.gmra.mxu0 %v628
        %v679 = vpop.f32.mrf.mxu0
        %v680 = vadd.f32 %v618, %v679
        %681 = vdwg.mxu0
        %682 = vst [vmem:[%s316] sm:$0xff] %v648
        %683 = vst [vmem:[%s316 + $0x8] sm:$0xff] %v674
        %684 = vst [vmem:[%s316 + $0x10] sm:$0xff] %v651
        %685 = vst [vmem:[%s316 + $0x18] sm:$0xff] %v677
        %686 = vst [vmem:[%s316 + $0x20] sm:$0xff] %v654
        %687 = vst [vmem:[%s316 + $0x28] sm:$0xff] %v680
        %s688 = sand.u32 %s200, 1
        %s689 = scalar_lea.sflag [#allocation4], %s688
        %s690 = sand.u32 %s200, 1
        %s691 = smul.addr %s690, 48
        %s692 = scalar_lea.vmem [#allocation5], %s691
        // Predicated region
        $region53: #{tpu_custom_call.1} parent=47 // pred_check
          %p693 = pneg %p210
        $region54: #{tpu_custom_call.1} parent=47 // pred_check_branch
          %695 = sbr.rel (%p693) target = $region56
        $region55: #{tpu_custom_call.1} parent=47 // pred_region
          %s696 = smul.u32 2, %s29
          %698 = vsyncadd %s689, 0
          %s699 = smul.addr %s28, 6
          %s700 = sadd.s32 %s696, %s699
          %s701 = smul.addr %s700, 8
          %s702 = scalar_lea.hbm %s7, %s701
          %s703 = sshll.u32 %s692, 4
          %s704 = int_to_ptr.vmem [resolvable:$true] %s703
          %s705 = sshll.u32 %s702, 4
          %s706 = int_to_ptr.hbm [resolvable:$true] %s705
          %711 = dma.vmem_to_hbm [thread:$0]  %s704, 768, %s706, %s689, 256, 256, 16
        $region56: #{tpu_custom_call.1} parent=47 // pred_fallthru
          _
      $region48: #{tpu_custom_call.1} parent=5 // pred_fallthru
        _
      %p712 = scmp.le.s32.totalorder 2, %s19
      // Predicated region
      $region57: #{tpu_custom_call.1} parent=5 // pred_check
        %p713 = pneg %p712
      $region58: #{tpu_custom_call.1} parent=5 // pred_check_branch
        %715 = sbr.rel (%p713) target = $region60
      $region59: #{tpu_custom_call.1} parent=5 // pred_region
        %s716 = ssub.s32 %s19, 2
        // Predicated region
        $region61: #{tpu_custom_call.1} parent=59 // pred_check
          %p717 = pneg %p216
        $region62: #{tpu_custom_call.1} parent=59 // pred_check_branch
          %719 = sbr.rel (%p717) target = $region64
        $region63: #{tpu_custom_call.1} parent=59 // pred_region
          %s720 = sand.u32 %s201, 1
          %s721 = scalar_lea.sflag [#allocation4], %s720
          %s722 = sand.u32 %s201, 1
          %s723 = smul.addr %s722, 48
          %s724 = scalar_lea.vmem [#allocation5], %s723
          %726 = dma.done %s721, 768
        $region64: #{tpu_custom_call.1} parent=59 // pred_fallthru
          _
      $region60: #{tpu_custom_call.1} parent=5 // pred_fallthru
        _
    $region6: #{tpu_custom_call.1} parent=1 // loop_footer
      %s23 = sadd.s32 1, %s19
    $region7: #{tpu_custom_call.1} parent=1 // loop_footer_branch
      %18 = sbr.rel target = $region3
    $region8: #{tpu_custom_call.1} parent=1 // loop_exit
      _
    %727 = vsyncpa [#allocation3], 1
    %s728 = scalar_lea.sflag [#allocation3], 1
    %729 = vsyncpa %s728, 1
    %730 = vsyncpa [#allocation4], 1
    %s731 = scalar_lea.sflag [#allocation4], 1
    %732 = vsyncpa %s731, 1

</llo_original>
